<compile_context>
chip_gen: v7x
topology: tpu7x:2x2x1
jax: 0.10.0
libtpu: 0.0.40
codegen_flags: <defaults>
</compile_context>

<pallas_src>
import math
import numpy as np
import jax
import jax.numpy as jnp
from jax import lax
from jax.experimental import pallas as pl
from jax.experimental.pallas import tpu as pltpu

D_MODEL = 6
# TODO(synk): `args.big` comes from an argparse flag never defined in the
# reference script; fixed here to a deterministic constant.
BIG = 1000.0

# ----- packed-slab row layout (all offsets static Python ints) -------------
LAYER_STRIDE = 24
R_WQKV = 0    # rows +0..+5 , cols 0:18   w_in.T   (Q part pre-scaled)
R_BIN  = 6    # row  +6     , cols 0:18   in_proj bias (Q part pre-scaled)
R_WOUT = 7    # rows +7..+12, cols 0:6    out_proj.weight.T
R_BOUT = 13   # row  +13    , cols 0:6    out_proj.bias
R_W1T  = 14   # rows +14..+19, col 0      linear1.weight.T  (6,1)
R_B1   = 20   # row  +20    , col 0       linear1.bias
R_W2T  = 21   # row  +21    , cols 0:6    linear2.weight.T  (1,6)
R_B2   = 22   # row  +22    , cols 0:6    linear2.bias
R_WO_T = 48   # rows 48..53 , col 0       output_layer.weight.T (6,1)
R_BO   = 54   # row  54     , col 0       output_layer.bias
SLAB_ROWS = 56
SLAB_COLS = 18


def _model_kernel(slab_ref, tok_ref, out_ref):
    n = tok_ref.shape[0]

    # --- embedding + positional encoding, built in-kernel ------------------
    tok = tok_ref[...]                                        # (n, 1) int32
    col = lax.broadcasted_iota(jnp.int32, (n, D_MODEL), 1)
    row = lax.broadcasted_iota(jnp.int32, (n, D_MODEL), 0)
    x = (col == tok).astype(jnp.float32)                      # eye(3,6)[w]
    x = x + jnp.where((row == 1) & (col == 3), 1.0, 0.0)      # pe[:,3]=(pos==1)

    def encoder_layer(x, base):
        w_qkv_t = slab_ref[base + R_WQKV:base + R_WQKV + 6, 0:18]   # (6,18)
        b_in    = slab_ref[base + R_BIN:base + R_BIN + 1, 0:18]     # (1,18)
        w_out_t = slab_ref[base + R_WOUT:base + R_WOUT + 6, 0:6]    # (6,6)
        b_out   = slab_ref[base + R_BOUT:base + R_BOUT + 1, 0:6]    # (1,6)
        w1_t    = slab_ref[base + R_W1T:base + R_W1T + 6, 0:1]      # (6,1)
        b1      = slab_ref[base + R_B1:base + R_B1 + 1, 0:1]        # (1,1)
        w2_t    = slab_ref[base + R_W2T:base + R_W2T + 1, 0:6]      # (1,6)
        b2      = slab_ref[base + R_B2:base + R_B2 + 1, 0:6]        # (1,6)

        # fused QKV projection (attention scale already folded into Q rows)
        qkv = jnp.dot(x, w_qkv_t, preferred_element_type=jnp.float32) + b_in
        q = qkv[:, 0:6]
        k = qkv[:, 6:12]
        v = qkv[:, 12:18]

        # q @ k^T without an in-kernel transpose
        scores = lax.dot_general(q, k, (((1,), (1,)), ((), ())),
                                 preferred_element_type=jnp.float32)   # (n,n)
        scores = scores - jnp.max(scores, axis=-1, keepdims=True)
        p = jnp.exp(scores)
        inv = pl.reciprocal(jnp.sum(p, axis=-1, keepdims=True), approx=True)
        attn = p * inv
        ctx = jnp.dot(attn, v, preferred_element_type=jnp.float32)
        src = x + jnp.dot(ctx, w_out_t,
                          preferred_element_type=jnp.float32) + b_out

        # FFN (dim_feedforward = 1): second matmul is just an outer broadcast
        h = jnp.maximum(
            jnp.dot(src, w1_t, preferred_element_type=jnp.float32) + b1, 0.0)
        ff = h * w2_t + b2                                      # (n,1)*(1,6)
        return src + ff

    y = encoder_layer(x, 0)
    y = encoder_layer(y, LAYER_STRIDE)

    y0 = y[0:1, :]                                              # y[0]
    wo_t = slab_ref[R_WO_T:R_WO_T + 6, 0:1]                     # (6,1)
    bo   = slab_ref[R_BO:R_BO + 1, 0:1]                         # (1,1)
    z = jnp.dot(y0, wo_t, preferred_element_type=jnp.float32) + bo   # (1,1)

    # lane-dense output store; wrapper reads [0, 0]
    out_ref[...] = jnp.broadcast_to(z, out_ref.shape)


# ---------------------------------------------------------------------------
# host-side parameter construction / packing
# ---------------------------------------------------------------------------
def make_params():
    f32 = np.float32
    # FirstLayer
    p1 = dict(
        w_in=np.zeros((18, 6), f32),
        b_in=np.zeros((1, 18), f32),
        w_out=np.zeros((6, 6), f32),
        b_out=np.zeros((1, 6), f32),
        w1=np.array([[0, 1, 0, 1, 0, 0]], f32),
        b1=np.array([[-1.0]], f32),
        w2=np.array([[0]] * 4 + [[1], [0]], f32),
        b2=np.zeros((1, 6), f32),
    )
    # SecondLayer
    w_in2 = np.array(
        [[0, 0, BIG, 0, 0, 0]] + [[0] * 6] * 5
        + [[0, 0, 0, 1, 0, 0]] + [[0] * 6] * 5
        + [[0] * 6] * 5 + [[0, 0, 0, -0.5, 1, 0]], f32)
    p2 = dict(
        w_in=w_in2,
        b_in=np.zeros((1, 18), f32),
        w_out=np.array([[0] * 6] * 5 + [[0, 0, 0, 0, 0, 1]], f32),
        b_out=np.zeros((1, 6), f32),
        w1=np.zeros((1, 6), f32),
        b1=np.zeros((1, 1), f32),
        w2=np.zeros((6, 1), f32),
        b2=np.zeros((1, 6), f32),
    )
    wo = np.array([[0, 0, 0, 0, 0, 1]], f32)      # output_layer weight (1,6)
    bo = np.array([[0.0]], f32)                   # output_layer bias
    return p1, p2, wo, bo


def pack_slab(p1, p2, wo, bo):
    """Pack all (pre-transposed, pre-scaled) parameters into one VMEM slab."""
    slab = np.zeros((SLAB_ROWS, SLAB_COLS), np.float32)
    scale = 1.0 / math.sqrt(D_MODEL)
    for l, p in enumerate((p1, p2)):
        base = l * LAYER_STRIDE
        w_in = np.asarray(p['w_in'], np.float32).copy()        # (18,6)
        b_in = np.asarray(p['b_in'], np.float32).reshape(18).copy()
        w_in[0:6] *= scale                                      # fold 1/sqrt(d)
        b_in[0:6] *= scale
        slab[base + R_WQKV:base + R_WQKV + 6, 0:18] = w_in.T    # (6,18)
        slab[base + R_BIN, 0:18] = b_in
        slab[base + R_WOUT:base + R_WOUT + 6, 0:6] = np.asarray(p['w_out']).T
        slab[base + R_BOUT, 0:6] = np.asarray(p['b_out']).reshape(6)
        slab[base + R_W1T:base + R_W1T + 6, 0:1] = np.asarray(p['w1']).T
        slab[base + R_B1, 0] = float(np.asarray(p['b1']).reshape(()))
        slab[base + R_W2T, 0:6] = np.asarray(p['w2']).reshape(6)
        slab[base + R_B2, 0:6] = np.asarray(p['b2']).reshape(6)
    slab[R_WO_T:R_WO_T + 6, 0:1] = np.asarray(wo, np.float32).T
    slab[R_BO, 0] = float(np.asarray(bo, np.float32).reshape(()))
    return jnp.asarray(slab)


def model_forward(w_tokens, slab):
    n = int(w_tokens.shape[0])
    tok = jnp.asarray(w_tokens, jnp.int32).reshape(n, 1)
    out = pl.pallas_call(
        _model_kernel,
        out_shape=jax.ShapeDtypeStruct((8, 128), jnp.float32),
        in_specs=[pl.BlockSpec(memory_space=pltpu.MemorySpace.VMEM),
                  pl.BlockSpec(memory_space=pltpu.MemorySpace.VMEM)],
        out_specs=pl.BlockSpec(memory_space=pltpu.MemorySpace.VMEM),
    )(slab, tok)
    return out[0, 0].reshape((1,))                # matches PyTorch z shape (1,)


# ---------------------------------------------------------------------------
# pure-JAX reference (raw params, exact division) for correctness check
# ---------------------------------------------------------------------------
def _encoder_layer_ref(x, w_in, b_in, w_out, b_out, w1, b1, w2, b2):
    q = x @ w_in[0:6].T + b_in[:, 0:6]
    k = x @ w_in[6:12].T + b_in[:, 6:12]
    v = x @ w_in[12:18].T + b_in[:, 12:18]
    q = q * (1.0 / math.sqrt(D_MODEL))
    s = q @ k.T
    s = s - jnp.max(s, axis=-1, keepdims=True)
    p = jnp.exp(s)
    attn = p / jnp.sum(p, axis=-1, keepdims=True)
    src = x + (attn @ v) @ w_out.T + b_out
    h = jnp.maximum(src @ w1.T + b1, 0.0)
    return src + h @ w2.T + b2


def model_forward_ref(w_tokens, p1, p2, wo, bo):
    n = w_tokens.shape[0]
    emb = jnp.eye(3, 6, dtype=jnp.float32)
    x = emb[w_tokens]
    pe = jnp.zeros((n, 6), jnp.float32).at[:, 3].set(
        (jnp.arange(n) == 1).astype(jnp.float32))
    x = x + pe
    y = _encoder_layer_ref(x, *(jnp.asarray(p1[k]) for k in
                                ('w_in', 'b_in', 'w_out', 'b_out',
                                 'w1', 'b1', 'w2', 'b2')))
    y = _encoder_layer_ref(y, *(jnp.asarray(p2[k]) for k in
                                ('w_in', 'b_in', 'w_out', 'b_out',
                                 'w1', 'b1', 'w2', 'b2')))
    return (y[0:1, :] @ jnp.asarray(wo).T + jnp.asarray(bo)).reshape((1,))


if __name__ == "__main__":
    key = jax.random.PRNGKey(0)
    n = 8                                           # sequence length len(w)
    w_tokens = jax.random.randint(key, (n,), 0, 3)  # word indices into eye(3,6)

    p1, p2, wo, bo = make_params()
    slab = pack_slab(p1, p2, wo, bo)

    z = model_forward(w_tokens, slab)
    z = jax.block_until_ready(z)

    z_ref = model_forward_ref(w_tokens, p1, p2, wo, bo)
    assert z.shape == (1,)
    # tolerance accounts for pl.reciprocal(approx=True) in the softmax
    assert np.allclose(np.asarray(z), np.asarray(z_ref),
                       atol=2e-3, rtol=2e-3), (z, z_ref)
    print("KERNEL_OK")
</pallas_src>

<mosaic_0001>
module attributes {stable_mosaic.version = 11 : i64} {
  func.func @_model_kernel(%arg0: memref<56x18xf32, #tpu.memory_space<vmem>>, %arg1: memref<8x1xi32, #tpu.memory_space<vmem>>, %arg2: memref<8x128xf32, #tpu.memory_space<vmem>>) attributes {dimension_semantics = [], scalar_prefetch = 0 : i64, scratch_operands = 0 : i64, tpu.core_type = #tpu.core_type<tc>} {
    %c0 = arith.constant 0 : index
    %c0_0 = arith.constant 0 : index
    %0 = vector.load %arg1[%c0, %c0_0] : memref<8x1xi32, #tpu.memory_space<vmem>>, vector<8x1xi32>
    %1 = tpu.iota {dimensions = array<i32: 1>} : vector<8x6xi32>
    %2 = tpu.iota {dimensions = array<i32: 0>} : vector<8x6xi32>
    %3 = vector.broadcast %0 : vector<8x1xi32> to vector<8x6xi32>
    %4 = arith.cmpi eq, %1, %3 : vector<8x6xi32>
    %5 = arith.extui %4 : vector<8x6xi1> to vector<8x6xi32>
    %6 = arith.sitofp %5 : vector<8x6xi32> to vector<8x6xf32>
    %c1_i32 = arith.constant 1 : i32
    %7 = vector.broadcast %c1_i32 : i32 to vector<8x6xi32>
    %8 = arith.cmpi eq, %2, %7 : vector<8x6xi32>
    %c3_i32 = arith.constant 3 : i32
    %9 = vector.broadcast %c3_i32 : i32 to vector<8x6xi32>
    %10 = arith.cmpi eq, %1, %9 : vector<8x6xi32>
    %11 = arith.andi %8, %10 : vector<8x6xi1>
    %cst = arith.constant 1.000000e+00 : f32
    %cst_1 = arith.constant 0.000000e+00 : f32
    %12 = vector.broadcast %cst : f32 to vector<8x6xf32>
    %13 = vector.broadcast %cst_1 : f32 to vector<8x6xf32>
    %14 = arith.select %11, %12, %13 : vector<8x6xi1>, vector<8x6xf32>
    %15 = arith.addf %6, %14 : vector<8x6xf32>
    %c0_2 = arith.constant 0 : index
    %c0_3 = arith.constant 0 : index
    %16 = vector.load %arg0[%c0_2, %c0_3] : memref<56x18xf32, #tpu.memory_space<vmem>>, vector<6x18xf32>
    %c6 = arith.constant 6 : index
    %c0_4 = arith.constant 0 : index
    %17 = vector.load %arg0[%c6, %c0_4] : memref<56x18xf32, #tpu.memory_space<vmem>>, vector<1x18xf32>
    %c7 = arith.constant 7 : index
    %c0_5 = arith.constant 0 : index
    %18 = vector.load %arg0[%c7, %c0_5] : memref<56x18xf32, #tpu.memory_space<vmem>>, vector<6x6xf32>
    %c13 = arith.constant 13 : index
    %c0_6 = arith.constant 0 : index
    %19 = vector.load %arg0[%c13, %c0_6] : memref<56x18xf32, #tpu.memory_space<vmem>>, vector<1x6xf32>
    %c14 = arith.constant 14 : index
    %c0_7 = arith.constant 0 : index
    %20 = vector.load %arg0[%c14, %c0_7] : memref<56x18xf32, #tpu.memory_space<vmem>>, vector<6x1xf32>
    %c20 = arith.constant 20 : index
    %c0_8 = arith.constant 0 : index
    %21 = vector.load %arg0[%c20, %c0_8] : memref<56x18xf32, #tpu.memory_space<vmem>>, vector<1x1xf32>
    %c21 = arith.constant 21 : index
    %c0_9 = arith.constant 0 : index
    %22 = vector.load %arg0[%c21, %c0_9] : memref<56x18xf32, #tpu.memory_space<vmem>>, vector<1x6xf32>
    %c22 = arith.constant 22 : index
    %c0_10 = arith.constant 0 : index
    %23 = vector.load %arg0[%c22, %c0_10] : memref<56x18xf32, #tpu.memory_space<vmem>>, vector<1x6xf32>
    %cst_11 = arith.constant dense<0.000000e+00> : vector<8x18xf32>
    %24 = tpu.matmul %15, %16, %cst_11 {dimension_numbers = #tpu.dot_dimension_numbers<[1], [0], [0], [1], [0, 0, 1, 1], [], []>} : vector<8x6xf32>, vector<6x18xf32>, vector<8x18xf32> -> vector<8x18xf32>
    %25 = vector.broadcast %17 : vector<1x18xf32> to vector<8x18xf32>
    %26 = arith.addf %24, %25 : vector<8x18xf32>
    %27 = vector.extract_strided_slice %26 {offsets = [0, 0], sizes = [8, 6], strides = [1, 1]} : vector<8x18xf32> to vector<8x6xf32>
    %28 = vector.extract_strided_slice %26 {offsets = [0, 6], sizes = [8, 6], strides = [1, 1]} : vector<8x18xf32> to vector<8x6xf32>
    %29 = vector.extract_strided_slice %26 {offsets = [0, 12], sizes = [8, 6], strides = [1, 1]} : vector<8x18xf32> to vector<8x6xf32>
    %cst_12 = arith.constant dense<0.000000e+00> : vector<8x8xf32>
    %30 = tpu.matmul %27, %28, %cst_12 {dimension_numbers = #tpu.dot_dimension_numbers<[1], [1], [0], [0], [0, 0, 1, 0], [], []>} : vector<8x6xf32>, vector<8x6xf32>, vector<8x8xf32> -> vector<8x8xf32>
    %cst_13 = arith.constant dense<0xFF800000> : vector<8xf32>
    %31 = vector.multi_reduction <maximumf>, %30, %cst_13 [1] : vector<8x8xf32> to vector<8xf32>
    %32 = vector.shape_cast %31 : vector<8xf32> to vector<8x1xf32>
    %33 = vector.broadcast %32 : vector<8x1xf32> to vector<8x8xf32>
    %34 = arith.subf %30, %33 : vector<8x8xf32>
    %35 = math.exp %34 : vector<8x8xf32>
    %cst_14 = arith.constant dense<0.000000e+00> : vector<8xf32>
    %36 = vector.multi_reduction <add>, %35, %cst_14 [1] : vector<8x8xf32> to vector<8xf32>
    %37 = vector.shape_cast %36 : vector<8xf32> to vector<8x1xf32>
    %38 = tpu.reciprocal %37 {approx = true} : vector<8x1xf32> -> vector<8x1xf32>
    %39 = vector.broadcast %38 : vector<8x1xf32> to vector<8x8xf32>
    %40 = arith.mulf %35, %39 : vector<8x8xf32>
    %cst_15 = arith.constant dense<0.000000e+00> : vector<8x6xf32>
    %41 = tpu.matmul %40, %29, %cst_15 {dimension_numbers = #tpu.dot_dimension_numbers<[1], [0], [0], [1], [0, 0, 1, 1], [], []>} : vector<8x8xf32>, vector<8x6xf32>, vector<8x6xf32> -> vector<8x6xf32>
    %cst_16 = arith.constant dense<0.000000e+00> : vector<8x6xf32>
    %42 = tpu.matmul %41, %18, %cst_16 {dimension_numbers = #tpu.dot_dimension_numbers<[1], [0], [0], [1], [0, 0, 1, 1], [], []>} : vector<8x6xf32>, vector<6x6xf32>, vector<8x6xf32> -> vector<8x6xf32>
    %43 = arith.addf %15, %42 : vector<8x6xf32>
    %44 = vector.broadcast %19 : vector<1x6xf32> to vector<8x6xf32>
    %45 = arith.addf %43, %44 : vector<8x6xf32>
    %cst_17 = arith.constant dense<0.000000e+00> : vector<8x1xf32>
    %46 = tpu.matmul %45, %20, %cst_17 {dimension_numbers = #tpu.dot_dimension_numbers<[1], [0], [0], [1], [0, 0, 1, 1], [], []>} : vector<8x6xf32>, vector<6x1xf32>, vector<8x1xf32> -> vector<8x1xf32>
    %47 = vector.broadcast %21 : vector<1x1xf32> to vector<8x1xf32>
    %48 = arith.addf %46, %47 : vector<8x1xf32>
    %cst_18 = arith.constant 0.000000e+00 : f32
    %49 = vector.broadcast %cst_18 : f32 to vector<8x1xf32>
    %50 = arith.maximumf %48, %49 : vector<8x1xf32>
    %51 = vector.broadcast %50 : vector<8x1xf32> to vector<8x6xf32>
    %52 = vector.broadcast %22 : vector<1x6xf32> to vector<8x6xf32>
    %53 = arith.mulf %51, %52 : vector<8x6xf32>
    %54 = vector.broadcast %23 : vector<1x6xf32> to vector<8x6xf32>
    %55 = arith.addf %53, %54 : vector<8x6xf32>
    %56 = arith.addf %45, %55 : vector<8x6xf32>
    %c24 = arith.constant 24 : index
    %c0_19 = arith.constant 0 : index
    %57 = vector.load %arg0[%c24, %c0_19] : memref<56x18xf32, #tpu.memory_space<vmem>>, vector<6x18xf32>
    %c30 = arith.constant 30 : index
    %c0_20 = arith.constant 0 : index
    %58 = vector.load %arg0[%c30, %c0_20] : memref<56x18xf32, #tpu.memory_space<vmem>>, vector<1x18xf32>
    %c31 = arith.constant 31 : index
    %c0_21 = arith.constant 0 : index
    %59 = vector.load %arg0[%c31, %c0_21] : memref<56x18xf32, #tpu.memory_space<vmem>>, vector<6x6xf32>
    %c37 = arith.constant 37 : index
    %c0_22 = arith.constant 0 : index
    %60 = vector.load %arg0[%c37, %c0_22] : memref<56x18xf32, #tpu.memory_space<vmem>>, vector<1x6xf32>
    %c38 = arith.constant 38 : index
    %c0_23 = arith.constant 0 : index
    %61 = vector.load %arg0[%c38, %c0_23] : memref<56x18xf32, #tpu.memory_space<vmem>>, vector<6x1xf32>
    %c44 = arith.constant 44 : index
    %c0_24 = arith.constant 0 : index
    %62 = vector.load %arg0[%c44, %c0_24] : memref<56x18xf32, #tpu.memory_space<vmem>>, vector<1x1xf32>
    %c45 = arith.constant 45 : index
    %c0_25 = arith.constant 0 : index
    %63 = vector.load %arg0[%c45, %c0_25] : memref<56x18xf32, #tpu.memory_space<vmem>>, vector<1x6xf32>
    %c46 = arith.constant 46 : index
    %c0_26 = arith.constant 0 : index
    %64 = vector.load %arg0[%c46, %c0_26] : memref<56x18xf32, #tpu.memory_space<vmem>>, vector<1x6xf32>
    %cst_27 = arith.constant dense<0.000000e+00> : vector<8x18xf32>
    %65 = tpu.matmul %56, %57, %cst_27 {dimension_numbers = #tpu.dot_dimension_numbers<[1], [0], [0], [1], [0, 0, 1, 1], [], []>} : vector<8x6xf32>, vector<6x18xf32>, vector<8x18xf32> -> vector<8x18xf32>
    %66 = vector.broadcast %58 : vector<1x18xf32> to vector<8x18xf32>
    %67 = arith.addf %65, %66 : vector<8x18xf32>
    %68 = vector.extract_strided_slice %67 {offsets = [0, 0], sizes = [8, 6], strides = [1, 1]} : vector<8x18xf32> to vector<8x6xf32>
    %69 = vector.extract_strided_slice %67 {offsets = [0, 6], sizes = [8, 6], strides = [1, 1]} : vector<8x18xf32> to vector<8x6xf32>
    %70 = vector.extract_strided_slice %67 {offsets = [0, 12], sizes = [8, 6], strides = [1, 1]} : vector<8x18xf32> to vector<8x6xf32>
    %cst_28 = arith.constant dense<0.000000e+00> : vector<8x8xf32>
    %71 = tpu.matmul %68, %69, %cst_28 {dimension_numbers = #tpu.dot_dimension_numbers<[1], [1], [0], [0], [0, 0, 1, 0], [], []>} : vector<8x6xf32>, vector<8x6xf32>, vector<8x8xf32> -> vector<8x8xf32>
    %cst_29 = arith.constant dense<0xFF800000> : vector<8xf32>
    %72 = vector.multi_reduction <maximumf>, %71, %cst_29 [1] : vector<8x8xf32> to vector<8xf32>
    %73 = vector.shape_cast %72 : vector<8xf32> to vector<8x1xf32>
    %74 = vector.broadcast %73 : vector<8x1xf32> to vector<8x8xf32>
    %75 = arith.subf %71, %74 : vector<8x8xf32>
    %76 = math.exp %75 : vector<8x8xf32>
    %cst_30 = arith.constant dense<0.000000e+00> : vector<8xf32>
    %77 = vector.multi_reduction <add>, %76, %cst_30 [1] : vector<8x8xf32> to vector<8xf32>
    %78 = vector.shape_cast %77 : vector<8xf32> to vector<8x1xf32>
    %79 = tpu.reciprocal %78 {approx = true} : vector<8x1xf32> -> vector<8x1xf32>
    %80 = vector.broadcast %79 : vector<8x1xf32> to vector<8x8xf32>
    %81 = arith.mulf %76, %80 : vector<8x8xf32>
    %cst_31 = arith.constant dense<0.000000e+00> : vector<8x6xf32>
    %82 = tpu.matmul %81, %70, %cst_31 {dimension_numbers = #tpu.dot_dimension_numbers<[1], [0], [0], [1], [0, 0, 1, 1], [], []>} : vector<8x8xf32>, vector<8x6xf32>, vector<8x6xf32> -> vector<8x6xf32>
    %cst_32 = arith.constant dense<0.000000e+00> : vector<8x6xf32>
    %83 = tpu.matmul %82, %59, %cst_32 {dimension_numbers = #tpu.dot_dimension_numbers<[1], [0], [0], [1], [0, 0, 1, 1], [], []>} : vector<8x6xf32>, vector<6x6xf32>, vector<8x6xf32> -> vector<8x6xf32>
    %84 = arith.addf %56, %83 : vector<8x6xf32>
    %85 = vector.broadcast %60 : vector<1x6xf32> to vector<8x6xf32>
    %86 = arith.addf %84, %85 : vector<8x6xf32>
    %cst_33 = arith.constant dense<0.000000e+00> : vector<8x1xf32>
    %87 = tpu.matmul %86, %61, %cst_33 {dimension_numbers = #tpu.dot_dimension_numbers<[1], [0], [0], [1], [0, 0, 1, 1], [], []>} : vector<8x6xf32>, vector<6x1xf32>, vector<8x1xf32> -> vector<8x1xf32>
    %88 = vector.broadcast %62 : vector<1x1xf32> to vector<8x1xf32>
    %89 = arith.addf %87, %88 : vector<8x1xf32>
    %cst_34 = arith.constant 0.000000e+00 : f32
    %90 = vector.broadcast %cst_34 : f32 to vector<8x1xf32>
    %91 = arith.maximumf %89, %90 : vector<8x1xf32>
    %92 = vector.broadcast %91 : vector<8x1xf32> to vector<8x6xf32>
    %93 = vector.broadcast %63 : vector<1x6xf32> to vector<8x6xf32>
    %94 = arith.mulf %92, %93 : vector<8x6xf32>
    %95 = vector.broadcast %64 : vector<1x6xf32> to vector<8x6xf32>
    %96 = arith.addf %94, %95 : vector<8x6xf32>
    %97 = arith.addf %86, %96 : vector<8x6xf32>
    %98 = vector.extract_strided_slice %97 {offsets = [0, 0], sizes = [1, 6], strides = [1, 1]} : vector<8x6xf32> to vector<1x6xf32>
    %c48 = arith.constant 48 : index
    %c0_35 = arith.constant 0 : index
    %99 = vector.load %arg0[%c48, %c0_35] : memref<56x18xf32, #tpu.memory_space<vmem>>, vector<6x1xf32>
    %c54 = arith.constant 54 : index
    %c0_36 = arith.constant 0 : index
    %100 = vector.load %arg0[%c54, %c0_36] : memref<56x18xf32, #tpu.memory_space<vmem>>, vector<1x1xf32>
    %cst_37 = arith.constant dense<0.000000e+00> : vector<1x1xf32>
    %101 = tpu.matmul %98, %99, %cst_37 {dimension_numbers = #tpu.dot_dimension_numbers<[1], [0], [0], [1], [0, 0, 1, 1], [], []>} : vector<1x6xf32>, vector<6x1xf32>, vector<1x1xf32> -> vector<1x1xf32>
    %102 = arith.addf %101, %100 : vector<1x1xf32>
    %103 = vector.shape_cast %102 : vector<1x1xf32> to vector<1x1xf32>
    %104 = vector.broadcast %103 : vector<1x1xf32> to vector<8x128xf32>
    %c0_38 = arith.constant 0 : index
    %c0_39 = arith.constant 0 : index
    %105 = vector.load %arg2[%c0_38, %c0_39] : memref<8x128xf32, #tpu.memory_space<vmem>>, vector<8x128xf32>
    tpu.vector_store %arg2[%c0_38, %c0_39], %104 {strides = array<i32>} : memref<8x128xf32, #tpu.memory_space<vmem>>, vector<8x128xf32>,
    return
  }
}

</mosaic_0001>

<llo_original>
// kernel: tpu_custom_call.1
$region0: #{tpu_custom_call.1}
  #allocation0 [shape = 'u32[]', space=smem, size = 0x4, offset = 0x4, fixed_abs, tag = 'smem constant byte address 0x4 - core index']
  #allocation1 [shape = 'u32[144,128]{1,0:T(1,128)}', space=vmem, size = 0x12000, scoped, tag = 'internal scratch']
  %s0 = inlined_call_operand.vmem [shape: f32[56,18], index: 0, kind: input, shape index: {}]
  %s1 = inlined_call_operand.vmem [shape: s32[8,1], index: 1, kind: input, shape index: {}]
  %s2 = inlined_call_operand.hbm [shape: f32[8,128], index: 2, kind: output, shape index: {}]
  %s3 = sld [smem:[#allocation0]]
  $region18: #{tpu_custom_call.1} parent=0
    _
  %s5 = ssub.s32 1, %s3
  %s6 = scalar_select 0, %s5, %s3
  $region1: #{tpu_custom_call.1} parent=0
    #allocation2 [shape = 'u8[4096]{0}', space=vmem, size = 0x1000, scoped, tag = 'output window, operand 0, single buffered']
    #allocation3 [shape = 's32[1]{0}', space=sflag, size = 0x4, scoped, tag = 'scoped memory for tpu_custom_call.1']
    %7 = vsyncpa [#allocation3], 0
    // Predicated region
    $region2: #{tpu_custom_call.1} parent=1 // pred_check
      _
    $region3: #{tpu_custom_call.1} parent=1 // pred_check_branch
      %9 = sbr.rel (0) target = $region5
    $region4: #{tpu_custom_call.1} parent=1 // pred_region
      _
    $region5: #{tpu_custom_call.1} parent=1 // pred_fallthru
      _
    // Predicated region
    $region6: #{tpu_custom_call.1} parent=1 // pred_check
      _
    $region7: #{tpu_custom_call.1} parent=1 // pred_check_branch
      %11 = sbr.rel (0) target = $region9
    $region8: #{tpu_custom_call.1} parent=1 // pred_region
      _
    $region9: #{tpu_custom_call.1} parent=1 // pred_fallthru
      _
    %v12 = vld [vmem:[%s1] sm:$0xff]
    %v13 = vlaneseq
    %v14 = vand.u32 %v13, 127
    %v15 = vlaneseq
    %v16 = vshrl.u32 %v15, 7
    %17 = vset.pattern.permute.xlu0 0
    %18 = vperm.xlu0 %17, %v12
    %v19 = vpop.permute.xlu0 %18
    %vm20 = vcmp.eq.s32.totalorder %v14, %v19
    %v21 = vsel %vm20, 1, 0
    %v22 = vcvt.s32.f32 %v21
    %vm23 = vcmp.eq.s32.totalorder %v16, 1
    %vm24 = vcmp.eq.s32.totalorder %v14, 3
    %vm25 = vmand %vm23, %vm24
    %v26 = vsel %vm25, 1.0, 0.0
    %v27 = vadd.f32 %v22, %v26
    %v28 = vld [vmem:[%s0] sm:$0x3f]
    %v29 = vld [vmem:[%s0 + $0x6] sm:$0x1]
    %v30 = vld [vmem:[%s0 + $0x7] sm:$0x3f]
    %v31 = vld [vmem:[%s0 + $0xd] sm:$0x1]
    %v32 = vld [vmem:[%s0 + $0xe] sm:$0x3f]
    %v33 = vld [vmem:[%s0 + $0x14] sm:$0x1]
    %v34 = vld [vmem:[%s0 + $0x15] sm:$0x1]
    %v35 = vld [vmem:[%s0 + $0x16] sm:$0x1]
    %v36 = vlaneseq
    %v37 = vshrl.u32 %v36, 7
    %v38 = vsub.s32 0, %v37
    %v39 = vrot.slane %v29, %v38
    %vm40 = vcmask 48128
    %v42 = vsel %vm40, %v27, 0
    %vm44 = vcmask 1045504
    %v46 = vsel %vm44, %v28, 0
    %48 = vmatprep.subr.mxu0 0.0
    %49 = vmatpush1.msra.mxu0 %v46
    %50 = vmatprep.subr.mxu0 0.0
    %51 = vmatpush1.msra.mxu0 0.0
    %52 = vmatprep.subr.mxu0 0.0
    %53 = vmatpush1.msra.mxu0 0.0
    %54 = vmatprep.subr.mxu0 0.0
    %55 = vmatpush1.msra.mxu0 0.0
    %56 = vmatprep.subr.mxu0 0.0
    %57 = vmatpush1.msra.mxu0 0.0
    %58 = vmatprep.subr.mxu0 0.0
    %59 = vmatpush1.msra.mxu0 0.0
    %60 = vmatprep.subr.mxu0 0.0
    %61 = vmatpush1.msra.mxu0 0.0
    %62 = vmatprep.subr.mxu0 0.0
    %63 = vmatpush1.msra.mxu0 0.0
    %64 = vmatprep.subr.mxu0 0.0
    %65 = vmatpush1.msra.mxu0 0.0
    %66 = vmatprep.subr.mxu0 0.0
    %67 = vmatpush1.msra.mxu0 0.0
    %68 = vmatprep.subr.mxu0 0.0
    %69 = vmatpush1.msra.mxu0 0.0
    %70 = vmatprep.subr.mxu0 0.0
    %71 = vmatpush1.msra.mxu0 0.0
    %72 = vmatprep.subr.mxu0 0.0
    %73 = vmatpush1.msra.mxu0 0.0
    %74 = vmatprep.subr.mxu0 0.0
    %75 = vmatpush1.msra.mxu0 0.0
    %76 = vmatprep.subr.mxu0 0.0
    %77 = vmatpush1.msra.mxu0 0.0
    %78 = vmatprep.subr.mxu0 0.0
    %79 = vmatpush1.msra.mxu0 0.0
    %80 = vmatprep.subr.mxu0 0.0
    %81 = vmatpush1.msra.mxu0 0.0
    %82 = vmatprep.subr.mxu0 0.0
    %83 = vmatpush1.msra.mxu0 0.0
    %84 = vmatprep.subr.mxu0 0.0
    %85 = vmatpush1.msra.mxu0 0.0
    %86 = vmatprep.subr.mxu0 0.0
    %87 = vmatpush1.msra.mxu0 0.0
    %88 = vmatprep.subr.mxu0 0.0
    %89 = vmatpush1.msra.mxu0 0.0
    %90 = vmatprep.subr.mxu0 0.0
    %91 = vmatpush1.msra.mxu0 0.0
    %92 = vmatprep.subr.mxu0 0.0
    %93 = vmatpush1.msra.mxu0 0.0
    %94 = vmatprep.subr.mxu0 0.0
    %95 = vmatpush1.msra.mxu0 0.0
    %96 = vmatprep.subr.mxu0 0.0
    %97 = vmatpush1.msra.mxu0 0.0
    %98 = vmatprep.subr.mxu0 0.0
    %99 = vmatpush1.msra.mxu0 0.0
    %100 = vmatprep.subr.mxu0 0.0
    %101 = vmatpush1.msra.mxu0 0.0
    %102 = vmatprep.subr.mxu0 0.0
    %103 = vmatpush1.msra.mxu0 0.0
    %104 = vmatprep.subr.mxu0 0.0
    %105 = vmatpush1.msra.mxu0 0.0
    %106 = vmatprep.subr.mxu0 0.0
    %107 = vmatpush1.msra.mxu0 0.0
    %108 = vmatprep.subr.mxu0 0.0
    %109 = vmatpush1.msra.mxu0 0.0
    %110 = vmatprep.subr.mxu0 0.0
    %111 = vmatpush1.msra.mxu0 0.0
    %112 = vmatprep.mubr.f32.mxu0 0.0
    %113 = vmatmul.mubr.f32.gmra.mrb[0].mxu0 %v42
    %v114 = vpop.f32.mrb[0].mxu0
    %v115 = vadd.f32 %v39, %v114
    %v116 = vpop.f32.mrb[0].mxu0
    %117 = vdwg.mxu0
    %119 = vrot.lane.b32.xlu0 %v115, 122
    %v120 = vpop.permute.xlu0 %119
    %v121 = vsel %vm40, %v115, 0
    %v123 = vsel %vm40, %v120, 0
    %125 = vmatprep.subr.mxu0 0.0
    %126 = vmatpush1.xpose.msra.mxu0 %v123
    %127 = vmatprep.subr.mxu0 0.0
    %128 = vmatpush1.xpose.msra.mxu0 0.0
    %129 = vmatprep.subr.mxu0 0.0
    %130 = vmatpush1.xpose.msra.mxu0 0.0
    %131 = vmatprep.subr.mxu0 0.0
    %132 = vmatpush1.xpose.msra.mxu0 0.0
    %133 = vmatprep.subr.mxu0 0.0
    %134 = vmatpush1.xpose.msra.mxu0 0.0
    %135 = vmatprep.subr.mxu0 0.0
    %136 = vmatpush1.xpose.msra.mxu0 0.0
    %137 = vmatprep.subr.mxu0 0.0
    %138 = vmatpush1.xpose.msra.mxu0 0.0
    %139 = vmatprep.subr.mxu0 0.0
    %140 = vmatpush1.xpose.msra.mxu0 0.0
    %141 = vmatprep.subr.mxu0 0.0
    %142 = vmatpush1.xpose.msra.mxu0 0.0
    %143 = vmatprep.subr.mxu0 0.0
    %144 = vmatpush1.xpose.msra.mxu0 0.0
    %145 = vmatprep.subr.mxu0 0.0
    %146 = vmatpush1.xpose.msra.mxu0 0.0
    %147 = vmatprep.subr.mxu0 0.0
    %148 = vmatpush1.xpose.msra.mxu0 0.0
    %149 = vmatprep.subr.mxu0 0.0
    %150 = vmatpush1.xpose.msra.mxu0 0.0
    %151 = vmatprep.subr.mxu0 0.0
    %152 = vmatpush1.xpose.msra.mxu0 0.0
    %153 = vmatprep.subr.mxu0 0.0
    %154 = vmatpush1.xpose.msra.mxu0 0.0
    %155 = vmatprep.subr.mxu0 0.0
    %156 = vmatpush1.xpose.msra.mxu0 0.0
    %157 = vmatprep.subr.mxu0 0.0
    %158 = vmatpush1.xpose.msra.mxu0 0.0
    %159 = vmatprep.subr.mxu0 0.0
    %160 = vmatpush1.xpose.msra.mxu0 0.0
    %161 = vmatprep.subr.mxu0 0.0
    %162 = vmatpush1.xpose.msra.mxu0 0.0
    %163 = vmatprep.subr.mxu0 0.0
    %164 = vmatpush1.xpose.msra.mxu0 0.0
    %165 = vmatprep.subr.mxu0 0.0
    %166 = vmatpush1.xpose.msra.mxu0 0.0
    %167 = vmatprep.subr.mxu0 0.0
    %168 = vmatpush1.xpose.msra.mxu0 0.0
    %169 = vmatprep.subr.mxu0 0.0
    %170 = vmatpush1.xpose.msra.mxu0 0.0
    %171 = vmatprep.subr.mxu0 0.0
    %172 = vmatpush1.xpose.msra.mxu0 0.0
    %173 = vmatprep.subr.mxu0 0.0
    %174 = vmatpush1.xpose.msra.mxu0 0.0
    %175 = vmatprep.subr.mxu0 0.0
    %176 = vmatpush1.xpose.msra.mxu0 0.0
    %177 = vmatprep.subr.mxu0 0.0
    %178 = vmatpush1.xpose.msra.mxu0 0.0
    %179 = vmatprep.subr.mxu0 0.0
    %180 = vmatpush1.xpose.msra.mxu0 0.0
    %181 = vmatprep.subr.mxu0 0.0
    %182 = vmatpush1.xpose.msra.mxu0 0.0
    %183 = vmatprep.subr.mxu0 0.0
    %184 = vmatpush1.xpose.msra.mxu0 0.0
    %185 = vmatprep.subr.mxu0 0.0
    %186 = vmatpush1.xpose.msra.mxu0 0.0
    %187 = vmatprep.subr.mxu0 0.0
    %188 = vmatpush1.xpose.msra.mxu0 0.0
    %189 = vmatprep.mubr.f32.mxu0 0.0
    %190 = vmatmul.mubr.f32.gmra.mrb[0].mxu0 %v121
    %v191 = vpop.f32.mrb[0].mxu0
    %v192 = vadd.f32 0.0, %v191
    %v193 = vpop.f32.mrb[0].mxu0
    %194 = vdwg.mxu0
    %vm195 = vcmask 64512
    %v196 = vsel %vm195, %v192, -inf
    %197 = vmax.xlane.f32.xlu0 %v196
    %v198 = vpop.xlane.xlu0 %197
    %v199 = vsub.f32 %v192, %v198
    %v200 = vmul.f32 %v199, 1.442695
    %v201 = vpow.pop %v200
    %v202 = vsel %vm195, %v201, 0.0
    %203 = vadd.xlane.f32.xlu0 %v202
    %v204 = vpop.xlane.xlu0 %203
    %v205 = vrcp.pop %v204
    %v206 = vmul.f32 %v201, %v205
    %207 = vrot.lane.b32.xlu0 %v115, 116
    %v208 = vpop.permute.xlu0 %207
    %v211 = vsel %vm195, %v206, 0
    %213 = vmatprep.subr.mxu0 0.0
    %214 = vmatpush1.msra.mxu0 %v208
    %215 = vmatprep.subr.mxu0 0.0
    %216 = vmatpush1.msra.mxu0 0.0
    %217 = vmatprep.subr.mxu0 0.0
    %218 = vmatpush1.msra.mxu0 0.0
    %219 = vmatprep.subr.mxu0 0.0
    %220 = vmatpush1.msra.mxu0 0.0
    %221 = vmatprep.subr.mxu0 0.0
    %222 = vmatpush1.msra.mxu0 0.0
    %223 = vmatprep.subr.mxu0 0.0
    %224 = vmatpush1.msra.mxu0 0.0
    %225 = vmatprep.subr.mxu0 0.0
    %226 = vmatpush1.msra.mxu0 0.0
    %227 = vmatprep.subr.mxu0 0.0
    %228 = vmatpush1.msra.mxu0 0.0
    %229 = vmatprep.subr.mxu0 0.0
    %230 = vmatpush1.msra.mxu0 0.0
    %231 = vmatprep.subr.mxu0 0.0
    %232 = vmatpush1.msra.mxu0 0.0
    %233 = vmatprep.subr.mxu0 0.0
    %234 = vmatpush1.msra.mxu0 0.0
    %235 = vmatprep.subr.mxu0 0.0
    %236 = vmatpush1.msra.mxu0 0.0
    %237 = vmatprep.subr.mxu0 0.0
    %238 = vmatpush1.msra.mxu0 0.0
    %239 = vmatprep.subr.mxu0 0.0
    %240 = vmatpush1.msra.mxu0 0.0
    %241 = vmatprep.subr.mxu0 0.0
    %242 = vmatpush1.msra.mxu0 0.0
    %243 = vmatprep.subr.mxu0 0.0
    %244 = vmatpush1.msra.mxu0 0.0
    %245 = vmatprep.subr.mxu0 0.0
    %246 = vmatpush1.msra.mxu0 0.0
    %247 = vmatprep.subr.mxu0 0.0
    %248 = vmatpush1.msra.mxu0 0.0
    %249 = vmatprep.subr.mxu0 0.0
    %250 = vmatpush1.msra.mxu0 0.0
    %251 = vmatprep.subr.mxu0 0.0
    %252 = vmatpush1.msra.mxu0 0.0
    %253 = vmatprep.subr.mxu0 0.0
    %254 = vmatpush1.msra.mxu0 0.0
    %255 = vmatprep.subr.mxu0 0.0
    %256 = vmatpush1.msra.mxu0 0.0
    %257 = vmatprep.subr.mxu0 0.0
    %258 = vmatpush1.msra.mxu0 0.0
    %259 = vmatprep.subr.mxu0 0.0
    %260 = vmatpush1.msra.mxu0 0.0
    %261 = vmatprep.subr.mxu0 0.0
    %262 = vmatpush1.msra.mxu0 0.0
    %263 = vmatprep.subr.mxu0 0.0
    %264 = vmatpush1.msra.mxu0 0.0
    %265 = vmatprep.subr.mxu0 0.0
    %266 = vmatpush1.msra.mxu0 0.0
    %267 = vmatprep.subr.mxu0 0.0
    %268 = vmatpush1.msra.mxu0 0.0
    %269 = vmatprep.subr.mxu0 0.0
    %270 = vmatpush1.msra.mxu0 0.0
    %271 = vmatprep.subr.mxu0 0.0
    %272 = vmatpush1.msra.mxu0 0.0
    %273 = vmatprep.subr.mxu0 0.0
    %274 = vmatpush1.msra.mxu0 0.0
    %275 = vmatprep.subr.mxu0 0.0
    %276 = vmatpush1.msra.mxu0 0.0
    %277 = vmatprep.mubr.f32.mxu0 0.0
    %278 = vmatmul.mubr.f32.gmra.mrb[0].mxu0 %v211
    %v279 = vpop.f32.mrb[0].mxu0
    %v280 = vadd.f32 0.0, %v279
    %v281 = vpop.f32.mrb[0].mxu0
    %282 = vdwg.mxu0
    %v284 = vsel %vm40, %v280, 0
    %v287 = vsel %vm44, %v30, 0
    %289 = vmatprep.subr.mxu0 0.0
    %290 = vmatpush1.msra.mxu0 %v287
    %291 = vmatprep.subr.mxu0 0.0
    %292 = vmatpush1.msra.mxu0 0.0
    %293 = vmatprep.subr.mxu0 0.0
    %294 = vmatpush1.msra.mxu0 0.0
    %295 = vmatprep.subr.mxu0 0.0
    %296 = vmatpush1.msra.mxu0 0.0
    %297 = vmatprep.subr.mxu0 0.0
    %298 = vmatpush1.msra.mxu0 0.0
    %299 = vmatprep.subr.mxu0 0.0
    %300 = vmatpush1.msra.mxu0 0.0
    %301 = vmatprep.subr.mxu0 0.0
    %302 = vmatpush1.msra.mxu0 0.0
    %303 = vmatprep.subr.mxu0 0.0
    %304 = vmatpush1.msra.mxu0 0.0
    %305 = vmatprep.subr.mxu0 0.0
    %306 = vmatpush1.msra.mxu0 0.0
    %307 = vmatprep.subr.mxu0 0.0
    %308 = vmatpush1.msra.mxu0 0.0
    %309 = vmatprep.subr.mxu0 0.0
    %310 = vmatpush1.msra.mxu0 0.0
    %311 = vmatprep.subr.mxu0 0.0
    %312 = vmatpush1.msra.mxu0 0.0
    %313 = vmatprep.subr.mxu0 0.0
    %314 = vmatpush1.msra.mxu0 0.0
    %315 = vmatprep.subr.mxu0 0.0
    %316 = vmatpush1.msra.mxu0 0.0
    %317 = vmatprep.subr.mxu0 0.0
    %318 = vmatpush1.msra.mxu0 0.0
    %319 = vmatprep.subr.mxu0 0.0
    %320 = vmatpush1.msra.mxu0 0.0
    %321 = vmatprep.subr.mxu0 0.0
    %322 = vmatpush1.msra.mxu0 0.0
    %323 = vmatprep.subr.mxu0 0.0
    %324 = vmatpush1.msra.mxu0 0.0
    %325 = vmatprep.subr.mxu0 0.0
    %326 = vmatpush1.msra.mxu0 0.0
    %327 = vmatprep.subr.mxu0 0.0
    %328 = vmatpush1.msra.mxu0 0.0
    %329 = vmatprep.subr.mxu0 0.0
    %330 = vmatpush1.msra.mxu0 0.0
    %331 = vmatprep.subr.mxu0 0.0
    %332 = vmatpush1.msra.mxu0 0.0
    %333 = vmatprep.subr.mxu0 0.0
    %334 = vmatpush1.msra.mxu0 0.0
    %335 = vmatprep.subr.mxu0 0.0
    %336 = vmatpush1.msra.mxu0 0.0
    %337 = vmatprep.subr.mxu0 0.0
    %338 = vmatpush1.msra.mxu0 0.0
    %339 = vmatprep.subr.mxu0 0.0
    %340 = vmatpush1.msra.mxu0 0.0
    %341 = vmatprep.subr.mxu0 0.0
    %342 = vmatpush1.msra.mxu0 0.0
    %343 = vmatprep.subr.mxu0 0.0
    %344 = vmatpush1.msra.mxu0 0.0
    %345 = vmatprep.subr.mxu0 0.0
    %346 = vmatpush1.msra.mxu0 0.0
    %347 = vmatprep.subr.mxu0 0.0
    %348 = vmatpush1.msra.mxu0 0.0
    %349 = vmatprep.subr.mxu0 0.0
    %350 = vmatpush1.msra.mxu0 0.0
    %351 = vmatprep.subr.mxu0 0.0
    %352 = vmatpush1.msra.mxu0 0.0
    %353 = vmatprep.mubr.f32.mxu0 0.0
    %354 = vmatmul.mubr.f32.gmra.mrb[0].mxu0 %v284
    %v355 = vpop.f32.mrb[0].mxu0
    %v356 = vadd.f32 0.0, %v355
    %v357 = vpop.f32.mrb[0].mxu0
    %358 = vdwg.mxu0
    %v359 = vadd.f32 %v27, %v356
    %v360 = vlaneseq
    %v361 = vshrl.u32 %v360, 7
    %v362 = vsub.s32 0, %v361
    %v363 = vrot.slane %v31, %v362
    %v364 = vadd.f32 %v359, %v363
    %v365 = vlaneseq
    %v366 = vshrl.u32 %v365, 7
    %v367 = vsub.s32 0, %v366
    %v368 = vrot.slane %v33, %v367
    %v370 = vsel %vm40, %v364, 0
    %v373 = vsel %vm44, %v32, 0
    %375 = vmatprep.subr.mxu0 0.0
    %376 = vmatpush1.msra.mxu0 %v373
    %377 = vmatprep.subr.mxu0 0.0
    %378 = vmatpush1.msra.mxu0 0.0
    %379 = vmatprep.subr.mxu0 0.0
    %380 = vmatpush1.msra.mxu0 0.0
    %381 = vmatprep.subr.mxu0 0.0
    %382 = vmatpush1.msra.mxu0 0.0
    %383 = vmatprep.subr.mxu0 0.0
    %384 = vmatpush1.msra.mxu0 0.0
    %385 = vmatprep.subr.mxu0 0.0
    %386 = vmatpush1.msra.mxu0 0.0
    %387 = vmatprep.subr.mxu0 0.0
    %388 = vmatpush1.msra.mxu0 0.0
    %389 = vmatprep.subr.mxu0 0.0
    %390 = vmatpush1.msra.mxu0 0.0
    %391 = vmatprep.subr.mxu0 0.0
    %392 = vmatpush1.msra.mxu0 0.0
    %393 = vmatprep.subr.mxu0 0.0
    %394 = vmatpush1.msra.mxu0 0.0
    %395 = vmatprep.subr.mxu0 0.0
    %396 = vmatpush1.msra.mxu0 0.0
    %397 = vmatprep.subr.mxu0 0.0
    %398 = vmatpush1.msra.mxu0 0.0
    %399 = vmatprep.subr.mxu0 0.0
    %400 = vmatpush1.msra.mxu0 0.0
    %401 = vmatprep.subr.mxu0 0.0
    %402 = vmatpush1.msra.mxu0 0.0
    %403 = vmatprep.subr.mxu0 0.0
    %404 = vmatpush1.msra.mxu0 0.0
    %405 = vmatprep.subr.mxu0 0.0
    %406 = vmatpush1.msra.mxu0 0.0
    %407 = vmatprep.subr.mxu0 0.0
    %408 = vmatpush1.msra.mxu0 0.0
    %409 = vmatprep.subr.mxu0 0.0
    %410 = vmatpush1.msra.mxu0 0.0
    %411 = vmatprep.subr.mxu0 0.0
    %412 = vmatpush1.msra.mxu0 0.0
    %413 = vmatprep.subr.mxu0 0.0
    %414 = vmatpush1.msra.mxu0 0.0
    %415 = vmatprep.subr.mxu0 0.0
    %416 = vmatpush1.msra.mxu0 0.0
    %417 = vmatprep.subr.mxu0 0.0
    %418 = vmatpush1.msra.mxu0 0.0
    %419 = vmatprep.subr.mxu0 0.0
    %420 = vmatpush1.msra.mxu0 0.0
    %421 = vmatprep.subr.mxu0 0.0
    %422 = vmatpush1.msra.mxu0 0.0
    %423 = vmatprep.subr.mxu0 0.0
    %424 = vmatpush1.msra.mxu0 0.0
    %425 = vmatprep.subr.mxu0 0.0
    %426 = vmatpush1.msra.mxu0 0.0
    %427 = vmatprep.subr.mxu0 0.0
    %428 = vmatpush1.msra.mxu0 0.0
    %429 = vmatprep.subr.mxu0 0.0
    %430 = vmatpush1.msra.mxu0 0.0
    %431 = vmatprep.subr.mxu0 0.0
    %432 = vmatpush1.msra.mxu0 0.0
    %433 = vmatprep.subr.mxu0 0.0
    %434 = vmatpush1.msra.mxu0 0.0
    %435 = vmatprep.subr.mxu0 0.0
    %436 = vmatpush1.msra.mxu0 0.0
    %437 = vmatprep.subr.mxu0 0.0
    %438 = vmatpush1.msra.mxu0 0.0
    %439 = vmatprep.mubr.f32.mxu0 0.0
    %440 = vmatmul.mubr.f32.gmra.mrb[0].mxu0 %v370
    %v441 = vpop.f32.mrb[0].mxu0
    %v442 = vadd.f32 %v368, %v441
    %v443 = vpop.f32.mrb[0].mxu0
    %444 = vdwg.mxu0
    %v445 = vmax.f32 %v442, 0.0
    %447 = vset.pattern.permute.xlu0 0
    %448 = vperm.xlu0 %447, %v445
    %v449 = vpop.permute.xlu0 %448
    %v451 = vlaneseq
    %v452 = vshrl.u32 %v451, 7
    %v453 = vsub.s32 0, %v452
    %v454 = vrot.slane %v34, %v453
    %v455 = vmul.f32 %v449, %v454
    %v456 = vlaneseq
    %v457 = vshrl.u32 %v456, 7
    %v458 = vsub.s32 0, %v457
    %v459 = vrot.slane %v35, %v458
    %v460 = vadd.f32 %v455, %v459
    %v461 = vadd.f32 %v364, %v460
    %v462 = vld [vmem:[%s0 + $0x18] sm:$0x3f]
    %v463 = vld [vmem:[%s0 + $0x1e] sm:$0x1]
    %v464 = vld [vmem:[%s0 + $0x1f] sm:$0x3f]
    %v465 = vld [vmem:[%s0 + $0x25] sm:$0x1]
    %v466 = vld [vmem:[%s0 + $0x26] sm:$0x3f]
    %v467 = vld [vmem:[%s0 + $0x2c] sm:$0x1]
    %v468 = vld [vmem:[%s0 + $0x2d] sm:$0x1]
    %v469 = vld [vmem:[%s0 + $0x2e] sm:$0x1]
    %v470 = vlaneseq
    %v471 = vshrl.u32 %v470, 7
    %v472 = vsub.s32 0, %v471
    %v473 = vrot.slane %v463, %v472
    %v475 = vsel %vm40, %v461, 0
    %v478 = vsel %vm44, %v462, 0
    %480 = vmatprep.subr.mxu0 0.0
    %481 = vmatpush1.msra.mxu0 %v478
    %482 = vmatprep.subr.mxu0 0.0
    %483 = vmatpush1.msra.mxu0 0.0
    %484 = vmatprep.subr.mxu0 0.0
    %485 = vmatpush1.msra.mxu0 0.0
    %486 = vmatprep.subr.mxu0 0.0
    %487 = vmatpush1.msra.mxu0 0.0
    %488 = vmatprep.subr.mxu0 0.0
    %489 = vmatpush1.msra.mxu0 0.0
    %490 = vmatprep.subr.mxu0 0.0
    %491 = vmatpush1.msra.mxu0 0.0
    %492 = vmatprep.subr.mxu0 0.0
    %493 = vmatpush1.msra.mxu0 0.0
    %494 = vmatprep.subr.mxu0 0.0
    %495 = vmatpush1.msra.mxu0 0.0
    %496 = vmatprep.subr.mxu0 0.0
    %497 = vmatpush1.msra.mxu0 0.0
    %498 = vmatprep.subr.mxu0 0.0
    %499 = vmatpush1.msra.mxu0 0.0
    %500 = vmatprep.subr.mxu0 0.0
    %501 = vmatpush1.msra.mxu0 0.0
    %502 = vmatprep.subr.mxu0 0.0
    %503 = vmatpush1.msra.mxu0 0.0
    %504 = vmatprep.subr.mxu0 0.0
    %505 = vmatpush1.msra.mxu0 0.0
    %506 = vmatprep.subr.mxu0 0.0
    %507 = vmatpush1.msra.mxu0 0.0
    %508 = vmatprep.subr.mxu0 0.0
    %509 = vmatpush1.msra.mxu0 0.0
    %510 = vmatprep.subr.mxu0 0.0
    %511 = vmatpush1.msra.mxu0 0.0
    %512 = vmatprep.subr.mxu0 0.0
    %513 = vmatpush1.msra.mxu0 0.0
    %514 = vmatprep.subr.mxu0 0.0
    %515 = vmatpush1.msra.mxu0 0.0
    %516 = vmatprep.subr.mxu0 0.0
    %517 = vmatpush1.msra.mxu0 0.0
    %518 = vmatprep.subr.mxu0 0.0
    %519 = vmatpush1.msra.mxu0 0.0
    %520 = vmatprep.subr.mxu0 0.0
    %521 = vmatpush1.msra.mxu0 0.0
    %522 = vmatprep.subr.mxu0 0.0
    %523 = vmatpush1.msra.mxu0 0.0
    %524 = vmatprep.subr.mxu0 0.0
    %525 = vmatpush1.msra.mxu0 0.0
    %526 = vmatprep.subr.mxu0 0.0
    %527 = vmatpush1.msra.mxu0 0.0
    %528 = vmatprep.subr.mxu0 0.0
    %529 = vmatpush1.msra.mxu0 0.0
    %530 = vmatprep.subr.mxu0 0.0
    %531 = vmatpush1.msra.mxu0 0.0
    %532 = vmatprep.subr.mxu0 0.0
    %533 = vmatpush1.msra.mxu0 0.0
    %534 = vmatprep.subr.mxu0 0.0
    %535 = vmatpush1.msra.mxu0 0.0
    %536 = vmatprep.subr.mxu0 0.0
    %537 = vmatpush1.msra.mxu0 0.0
    %538 = vmatprep.subr.mxu0 0.0
    %539 = vmatpush1.msra.mxu0 0.0
    %540 = vmatprep.subr.mxu0 0.0
    %541 = vmatpush1.msra.mxu0 0.0
    %542 = vmatprep.subr.mxu0 0.0
    %543 = vmatpush1.msra.mxu0 0.0
    %544 = vmatprep.mubr.f32.mxu0 0.0
    %545 = vmatmul.mubr.f32.gmra.mrb[0].mxu0 %v475
    %v546 = vpop.f32.mrb[0].mxu0
    %v547 = vadd.f32 %v473, %v546
    %v548 = vpop.f32.mrb[0].mxu0
    %549 = vdwg.mxu0
    %551 = vrot.lane.b32.xlu0 %v547, 122
    %v552 = vpop.permute.xlu0 %551
    %v553 = vsel %vm40, %v547, 0
    %v555 = vsel %vm40, %v552, 0
    %557 = vmatprep.subr.mxu0 0.0
    %558 = vmatpush1.xpose.msra.mxu0 %v555
    %559 = vmatprep.subr.mxu0 0.0
    %560 = vmatpush1.xpose.msra.mxu0 0.0
    %561 = vmatprep.subr.mxu0 0.0
    %562 = vmatpush1.xpose.msra.mxu0 0.0
    %563 = vmatprep.subr.mxu0 0.0
    %564 = vmatpush1.xpose.msra.mxu0 0.0
    %565 = vmatprep.subr.mxu0 0.0
    %566 = vmatpush1.xpose.msra.mxu0 0.0
    %567 = vmatprep.subr.mxu0 0.0
    %568 = vmatpush1.xpose.msra.mxu0 0.0
    %569 = vmatprep.subr.mxu0 0.0
    %570 = vmatpush1.xpose.msra.mxu0 0.0
    %571 = vmatprep.subr.mxu0 0.0
    %572 = vmatpush1.xpose.msra.mxu0 0.0
    %573 = vmatprep.subr.mxu0 0.0
    %574 = vmatpush1.xpose.msra.mxu0 0.0
    %575 = vmatprep.subr.mxu0 0.0
    %576 = vmatpush1.xpose.msra.mxu0 0.0
    %577 = vmatprep.subr.mxu0 0.0
    %578 = vmatpush1.xpose.msra.mxu0 0.0
    %579 = vmatprep.subr.mxu0 0.0
    %580 = vmatpush1.xpose.msra.mxu0 0.0
    %581 = vmatprep.subr.mxu0 0.0
    %582 = vmatpush1.xpose.msra.mxu0 0.0
    %583 = vmatprep.subr.mxu0 0.0
    %584 = vmatpush1.xpose.msra.mxu0 0.0
    %585 = vmatprep.subr.mxu0 0.0
    %586 = vmatpush1.xpose.msra.mxu0 0.0
    %587 = vmatprep.subr.mxu0 0.0
    %588 = vmatpush1.xpose.msra.mxu0 0.0
    %589 = vmatprep.subr.mxu0 0.0
    %590 = vmatpush1.xpose.msra.mxu0 0.0
    %591 = vmatprep.subr.mxu0 0.0
    %592 = vmatpush1.xpose.msra.mxu0 0.0
    %593 = vmatprep.subr.mxu0 0.0
    %594 = vmatpush1.xpose.msra.mxu0 0.0
    %595 = vmatprep.subr.mxu0 0.0
    %596 = vmatpush1.xpose.msra.mxu0 0.0
    %597 = vmatprep.subr.mxu0 0.0
    %598 = vmatpush1.xpose.msra.mxu0 0.0
    %599 = vmatprep.subr.mxu0 0.0
    %600 = vmatpush1.xpose.msra.mxu0 0.0
    %601 = vmatprep.subr.mxu0 0.0
    %602 = vmatpush1.xpose.msra.mxu0 0.0
    %603 = vmatprep.subr.mxu0 0.0
    %604 = vmatpush1.xpose.msra.mxu0 0.0
    %605 = vmatprep.subr.mxu0 0.0
    %606 = vmatpush1.xpose.msra.mxu0 0.0
    %607 = vmatprep.subr.mxu0 0.0
    %608 = vmatpush1.xpose.msra.mxu0 0.0
    %609 = vmatprep.subr.mxu0 0.0
    %610 = vmatpush1.xpose.msra.mxu0 0.0
    %611 = vmatprep.subr.mxu0 0.0
    %612 = vmatpush1.xpose.msra.mxu0 0.0
    %613 = vmatprep.subr.mxu0 0.0
    %614 = vmatpush1.xpose.msra.mxu0 0.0
    %615 = vmatprep.subr.mxu0 0.0
    %616 = vmatpush1.xpose.msra.mxu0 0.0
    %617 = vmatprep.subr.mxu0 0.0
    %618 = vmatpush1.xpose.msra.mxu0 0.0
    %619 = vmatprep.subr.mxu0 0.0
    %620 = vmatpush1.xpose.msra.mxu0 0.0
    %621 = vmatprep.mubr.f32.mxu0 0.0
    %622 = vmatmul.mubr.f32.gmra.mrb[0].mxu0 %v553
    %v623 = vpop.f32.mrb[0].mxu0
    %v624 = vadd.f32 0.0, %v623
    %v625 = vpop.f32.mrb[0].mxu0
    %626 = vdwg.mxu0
    %v627 = vsel %vm195, %v624, -inf
    %628 = vmax.xlane.f32.xlu0 %v627
    %v629 = vpop.xlane.xlu0 %628
    %v630 = vsub.f32 %v624, %v629
    %v631 = vmul.f32 %v630, 1.442695
    %v632 = vpow.pop %v631
    %v633 = vsel %vm195, %v632, 0.0
    %634 = vadd.xlane.f32.xlu0 %v633
    %v635 = vpop.xlane.xlu0 %634
    %v636 = vrcp.pop %v635
    %v637 = vmul.f32 %v632, %v636
    %638 = vrot.lane.b32.xlu0 %v547, 116
    %v639 = vpop.permute.xlu0 %638
    %v642 = vsel %vm195, %v637, 0
    %644 = vmatprep.subr.mxu0 0.0
    %645 = vmatpush1.msra.mxu0 %v639
    %646 = vmatprep.subr.mxu0 0.0
    %647 = vmatpush1.msra.mxu0 0.0
    %648 = vmatprep.subr.mxu0 0.0
    %649 = vmatpush1.msra.mxu0 0.0
    %650 = vmatprep.subr.mxu0 0.0
    %651 = vmatpush1.msra.mxu0 0.0
    %652 = vmatprep.subr.mxu0 0.0
    %653 = vmatpush1.msra.mxu0 0.0
    %654 = vmatprep.subr.mxu0 0.0
    %655 = vmatpush1.msra.mxu0 0.0
    %656 = vmatprep.subr.mxu0 0.0
    %657 = vmatpush1.msra.mxu0 0.0
    %658 = vmatprep.subr.mxu0 0.0
    %659 = vmatpush1.msra.mxu0 0.0
    %660 = vmatprep.subr.mxu0 0.0
    %661 = vmatpush1.msra.mxu0 0.0
    %662 = vmatprep.subr.mxu0 0.0
    %663 = vmatpush1.msra.mxu0 0.0
    %664 = vmatprep.subr.mxu0 0.0
    %665 = vmatpush1.msra.mxu0 0.0
    %666 = vmatprep.subr.mxu0 0.0
    %667 = vmatpush1.msra.mxu0 0.0
    %668 = vmatprep.subr.mxu0 0.0
    %669 = vmatpush1.msra.mxu0 0.0
    %670 = vmatprep.subr.mxu0 0.0
    %671 = vmatpush1.msra.mxu0 0.0
    %672 = vmatprep.subr.mxu0 0.0
    %673 = vmatpush1.msra.mxu0 0.0
    %674 = vmatprep.subr.mxu0 0.0
    %675 = vmatpush1.msra.mxu0 0.0
    %676 = vmatprep.subr.mxu0 0.0
    %677 = vmatpush1.msra.mxu0 0.0
    %678 = vmatprep.subr.mxu0 0.0
    %679 = vmatpush1.msra.mxu0 0.0
    %680 = vmatprep.subr.mxu0 0.0
    %681 = vmatpush1.msra.mxu0 0.0
    %682 = vmatprep.subr.mxu0 0.0
    %683 = vmatpush1.msra.mxu0 0.0
    %684 = vmatprep.subr.mxu0 0.0
    %685 = vmatpush1.msra.mxu0 0.0
    %686 = vmatprep.subr.mxu0 0.0
    %687 = vmatpush1.msra.mxu0 0.0
    %688 = vmatprep.subr.mxu0 0.0
    %689 = vmatpush1.msra.mxu0 0.0
    %690 = vmatprep.subr.mxu0 0.0
    %691 = vmatpush1.msra.mxu0 0.0
    %692 = vmatprep.subr.mxu0 0.0
    %693 = vmatpush1.msra.mxu0 0.0
    %694 = vmatprep.subr.mxu0 0.0
    %695 = vmatpush1.msra.mxu0 0.0
    %696 = vmatprep.subr.mxu0 0.0
    %697 = vmatpush1.msra.mxu0 0.0
    %698 = vmatprep.subr.mxu0 0.0
    %699 = vmatpush1.msra.mxu0 0.0
    %700 = vmatprep.subr.mxu0 0.0
    %701 = vmatpush1.msra.mxu0 0.0
    %702 = vmatprep.subr.mxu0 0.0
    %703 = vmatpush1.msra.mxu0 0.0
    %704 = vmatprep.subr.mxu0 0.0
    %705 = vmatpush1.msra.mxu0 0.0
    %706 = vmatprep.subr.mxu0 0.0
    %707 = vmatpush1.msra.mxu0 0.0
    %708 = vmatprep.mubr.f32.mxu0 0.0
    %709 = vmatmul.mubr.f32.gmra.mrb[0].mxu0 %v642
    %v710 = vpop.f32.mrb[0].mxu0
    %v711 = vadd.f32 0.0, %v710
    %v712 = vpop.f32.mrb[0].mxu0
    %713 = vdwg.mxu0
    %v715 = vsel %vm40, %v711, 0
    %v718 = vsel %vm44, %v464, 0
    %720 = vmatprep.subr.mxu0 0.0
    %721 = vmatpush1.msra.mxu0 %v718
    %722 = vmatprep.subr.mxu0 0.0
    %723 = vmatpush1.msra.mxu0 0.0
    %724 = vmatprep.subr.mxu0 0.0
    %725 = vmatpush1.msra.mxu0 0.0
    %726 = vmatprep.subr.mxu0 0.0
    %727 = vmatpush1.msra.mxu0 0.0
    %728 = vmatprep.subr.mxu0 0.0
    %729 = vmatpush1.msra.mxu0 0.0
    %730 = vmatprep.subr.mxu0 0.0
    %731 = vmatpush1.msra.mxu0 0.0
    %732 = vmatprep.subr.mxu0 0.0
    %733 = vmatpush1.msra.mxu0 0.0
    %734 = vmatprep.subr.mxu0 0.0
    %735 = vmatpush1.msra.mxu0 0.0
    %736 = vmatprep.subr.mxu0 0.0
    %737 = vmatpush1.msra.mxu0 0.0
    %738 = vmatprep.subr.mxu0 0.0
    %739 = vmatpush1.msra.mxu0 0.0
    %740 = vmatprep.subr.mxu0 0.0
    %741 = vmatpush1.msra.mxu0 0.0
    %742 = vmatprep.subr.mxu0 0.0
    %743 = vmatpush1.msra.mxu0 0.0
    %744 = vmatprep.subr.mxu0 0.0
    %745 = vmatpush1.msra.mxu0 0.0
    %746 = vmatprep.subr.mxu0 0.0
    %747 = vmatpush1.msra.mxu0 0.0
    %748 = vmatprep.subr.mxu0 0.0
    %749 = vmatpush1.msra.mxu0 0.0
    %750 = vmatprep.subr.mxu0 0.0
    %751 = vmatpush1.msra.mxu0 0.0
    %752 = vmatprep.subr.mxu0 0.0
    %753 = vmatpush1.msra.mxu0 0.0
    %754 = vmatprep.subr.mxu0 0.0
    %755 = vmatpush1.msra.mxu0 0.0
    %756 = vmatprep.subr.mxu0 0.0
    %757 = vmatpush1.msra.mxu0 0.0
    %758 = vmatprep.subr.mxu0 0.0
    %759 = vmatpush1.msra.mxu0 0.0
    %760 = vmatprep.subr.mxu0 0.0
    %761 = vmatpush1.msra.mxu0 0.0
    %762 = vmatprep.subr.mxu0 0.0
    %763 = vmatpush1.msra.mxu0 0.0
    %764 = vmatprep.subr.mxu0 0.0
    %765 = vmatpush1.msra.mxu0 0.0
    %766 = vmatprep.subr.mxu0 0.0
    %767 = vmatpush1.msra.mxu0 0.0
    %768 = vmatprep.subr.mxu0 0.0
    %769 = vmatpush1.msra.mxu0 0.0
    %770 = vmatprep.subr.mxu0 0.0
    %771 = vmatpush1.msra.mxu0 0.0
    %772 = vmatprep.subr.mxu0 0.0
    %773 = vmatpush1.msra.mxu0 0.0
    %774 = vmatprep.subr.mxu0 0.0
    %775 = vmatpush1.msra.mxu0 0.0
    %776 = vmatprep.subr.mxu0 0.0
    %777 = vmatpush1.msra.mxu0 0.0
    %778 = vmatprep.subr.mxu0 0.0
    %779 = vmatpush1.msra.mxu0 0.0
    %780 = vmatprep.subr.mxu0 0.0
    %781 = vmatpush1.msra.mxu0 0.0
    %782 = vmatprep.subr.mxu0 0.0
    %783 = vmatpush1.msra.mxu0 0.0
    %784 = vmatprep.mubr.f32.mxu0 0.0
    %785 = vmatmul.mubr.f32.gmra.mrb[0].mxu0 %v715
    %v786 = vpop.f32.mrb[0].mxu0
    %v787 = vadd.f32 0.0, %v786
    %v788 = vpop.f32.mrb[0].mxu0
    %789 = vdwg.mxu0
    %v790 = vadd.f32 %v461, %v787
    %v791 = vlaneseq
    %v792 = vshrl.u32 %v791, 7
    %v793 = vsub.s32 0, %v792
    %v794 = vrot.slane %v465, %v793
    %v795 = vadd.f32 %v790, %v794
    %v796 = vlaneseq
    %v797 = vshrl.u32 %v796, 7
    %v798 = vsub.s32 0, %v797
    %v799 = vrot.slane %v467, %v798
    %v801 = vsel %vm40, %v795, 0
    %v804 = vsel %vm44, %v466, 0
    %806 = vmatprep.subr.mxu0 0.0
    %807 = vmatpush1.msra.mxu0 %v804
    %808 = vmatprep.subr.mxu0 0.0
    %809 = vmatpush1.msra.mxu0 0.0
    %810 = vmatprep.subr.mxu0 0.0
    %811 = vmatpush1.msra.mxu0 0.0
    %812 = vmatprep.subr.mxu0 0.0
    %813 = vmatpush1.msra.mxu0 0.0
    %814 = vmatprep.subr.mxu0 0.0
    %815 = vmatpush1.msra.mxu0 0.0
    %816 = vmatprep.subr.mxu0 0.0
    %817 = vmatpush1.msra.mxu0 0.0
    %818 = vmatprep.subr.mxu0 0.0
    %819 = vmatpush1.msra.mxu0 0.0
    %820 = vmatprep.subr.mxu0 0.0
    %821 = vmatpush1.msra.mxu0 0.0
    %822 = vmatprep.subr.mxu0 0.0
    %823 = vmatpush1.msra.mxu0 0.0
    %824 = vmatprep.subr.mxu0 0.0
    %825 = vmatpush1.msra.mxu0 0.0
    %826 = vmatprep.subr.mxu0 0.0
    %827 = vmatpush1.msra.mxu0 0.0
    %828 = vmatprep.subr.mxu0 0.0
    %829 = vmatpush1.msra.mxu0 0.0
    %830 = vmatprep.subr.mxu0 0.0
    %831 = vmatpush1.msra.mxu0 0.0
    %832 = vmatprep.subr.mxu0 0.0
    %833 = vmatpush1.msra.mxu0 0.0
    %834 = vmatprep.subr.mxu0 0.0
    %835 = vmatpush1.msra.mxu0 0.0
    %836 = vmatprep.subr.mxu0 0.0
    %837 = vmatpush1.msra.mxu0 0.0
    %838 = vmatprep.subr.mxu0 0.0
    %839 = vmatpush1.msra.mxu0 0.0
    %840 = vmatprep.subr.mxu0 0.0
    %841 = vmatpush1.msra.mxu0 0.0
    %842 = vmatprep.subr.mxu0 0.0
    %843 = vmatpush1.msra.mxu0 0.0
    %844 = vmatprep.subr.mxu0 0.0
    %845 = vmatpush1.msra.mxu0 0.0
    %846 = vmatprep.subr.mxu0 0.0
    %847 = vmatpush1.msra.mxu0 0.0
    %848 = vmatprep.subr.mxu0 0.0
    %849 = vmatpush1.msra.mxu0 0.0
    %850 = vmatprep.subr.mxu0 0.0
    %851 = vmatpush1.msra.mxu0 0.0
    %852 = vmatprep.subr.mxu0 0.0
    %853 = vmatpush1.msra.mxu0 0.0
    %854 = vmatprep.subr.mxu0 0.0
    %855 = vmatpush1.msra.mxu0 0.0
    %856 = vmatprep.subr.mxu0 0.0
    %857 = vmatpush1.msra.mxu0 0.0
    %858 = vmatprep.subr.mxu0 0.0
    %859 = vmatpush1.msra.mxu0 0.0
    %860 = vmatprep.subr.mxu0 0.0
    %861 = vmatpush1.msra.mxu0 0.0
    %862 = vmatprep.subr.mxu0 0.0
    %863 = vmatpush1.msra.mxu0 0.0
    %864 = vmatprep.subr.mxu0 0.0
    %865 = vmatpush1.msra.mxu0 0.0
    %866 = vmatprep.subr.mxu0 0.0
    %867 = vmatpush1.msra.mxu0 0.0
    %868 = vmatprep.subr.mxu0 0.0
    %869 = vmatpush1.msra.mxu0 0.0
    %870 = vmatprep.mubr.f32.mxu0 0.0
    %871 = vmatmul.mubr.f32.gmra.mrb[0].mxu0 %v801
    %v872 = vpop.f32.mrb[0].mxu0
    %v873 = vadd.f32 %v799, %v872
    %v874 = vpop.f32.mrb[0].mxu0
    %875 = vdwg.mxu0
    %v876 = vmax.f32 %v873, 0.0
    %878 = vset.pattern.permute.xlu0 0
    %879 = vperm.xlu0 %878, %v876
    %v880 = vpop.permute.xlu0 %879
    %v882 = vlaneseq
    %v883 = vshrl.u32 %v882, 7
    %v884 = vsub.s32 0, %v883
    %v885 = vrot.slane %v468, %v884
    %v886 = vmul.f32 %v880, %v885
    %v887 = vlaneseq
    %v888 = vshrl.u32 %v887, 7
    %v889 = vsub.s32 0, %v888
    %v890 = vrot.slane %v469, %v889
    %v891 = vadd.f32 %v886, %v890
    %v892 = vadd.f32 %v795, %v891
    %v893 = vld [vmem:[%s0 + $0x30] sm:$0x3f]
    %v894 = vld [vmem:[%s0 + $0x36] sm:$0x1]
    %v896 = vsel %vm40, %v892, 0
    %v899 = vsel %vm44, %v893, 0
    %901 = vmatprep.subr.mxu0 0.0
    %902 = vmatpush1.msra.mxu0 %v899
    %903 = vmatprep.subr.mxu0 0.0
    %904 = vmatpush1.msra.mxu0 0.0
    %905 = vmatprep.subr.mxu0 0.0
    %906 = vmatpush1.msra.mxu0 0.0
    %907 = vmatprep.subr.mxu0 0.0
    %908 = vmatpush1.msra.mxu0 0.0
    %909 = vmatprep.subr.mxu0 0.0
    %910 = vmatpush1.msra.mxu0 0.0
    %911 = vmatprep.subr.mxu0 0.0
    %912 = vmatpush1.msra.mxu0 0.0
    %913 = vmatprep.subr.mxu0 0.0
    %914 = vmatpush1.msra.mxu0 0.0
    %915 = vmatprep.subr.mxu0 0.0
    %916 = vmatpush1.msra.mxu0 0.0
    %917 = vmatprep.subr.mxu0 0.0
    %918 = vmatpush1.msra.mxu0 0.0
    %919 = vmatprep.subr.mxu0 0.0
    %920 = vmatpush1.msra.mxu0 0.0
    %921 = vmatprep.subr.mxu0 0.0
    %922 = vmatpush1.msra.mxu0 0.0
    %923 = vmatprep.subr.mxu0 0.0
    %924 = vmatpush1.msra.mxu0 0.0
    %925 = vmatprep.subr.mxu0 0.0
    %926 = vmatpush1.msra.mxu0 0.0
    %927 = vmatprep.subr.mxu0 0.0
    %928 = vmatpush1.msra.mxu0 0.0
    %929 = vmatprep.subr.mxu0 0.0
    %930 = vmatpush1.msra.mxu0 0.0
    %931 = vmatprep.subr.mxu0 0.0
    %932 = vmatpush1.msra.mxu0 0.0
    %933 = vmatprep.subr.mxu0 0.0
    %934 = vmatpush1.msra.mxu0 0.0
    %935 = vmatprep.subr.mxu0 0.0
    %936 = vmatpush1.msra.mxu0 0.0
    %937 = vmatprep.subr.mxu0 0.0
    %938 = vmatpush1.msra.mxu0 0.0
    %939 = vmatprep.subr.mxu0 0.0
    %940 = vmatpush1.msra.mxu0 0.0
    %941 = vmatprep.subr.mxu0 0.0
    %942 = vmatpush1.msra.mxu0 0.0
    %943 = vmatprep.subr.mxu0 0.0
    %944 = vmatpush1.msra.mxu0 0.0
    %945 = vmatprep.subr.mxu0 0.0
    %946 = vmatpush1.msra.mxu0 0.0
    %947 = vmatprep.subr.mxu0 0.0
    %948 = vmatpush1.msra.mxu0 0.0
    %949 = vmatprep.subr.mxu0 0.0
    %950 = vmatpush1.msra.mxu0 0.0
    %951 = vmatprep.subr.mxu0 0.0
    %952 = vmatpush1.msra.mxu0 0.0
    %953 = vmatprep.subr.mxu0 0.0
    %954 = vmatpush1.msra.mxu0 0.0
    %955 = vmatprep.subr.mxu0 0.0
    %956 = vmatpush1.msra.mxu0 0.0
    %957 = vmatprep.subr.mxu0 0.0
    %958 = vmatpush1.msra.mxu0 0.0
    %959 = vmatprep.subr.mxu0 0.0
    %960 = vmatpush1.msra.mxu0 0.0
    %961 = vmatprep.subr.mxu0 0.0
    %962 = vmatpush1.msra.mxu0 0.0
    %963 = vmatprep.subr.mxu0 0.0
    %964 = vmatpush1.msra.mxu0 0.0
    %965 = vmatprep.mubr.f32.mxu0 0.0
    %966 = vmatmul.mubr.f32.gmra.mrb[0].mxu0 %v896
    %v967 = vpop.f32.mrb[0].mxu0
    %v968 = vadd.f32 %v894, %v967
    %v969 = vpop.f32.mrb[0].mxu0
    %970 = vdwg.mxu0
    %s972 = vtos %v968
    %v973 = vstv %s972
    %975 = vst [vmem:[#allocation2] sm:$0xff] %v973
    // Predicated region
    $region10: #{tpu_custom_call.1} parent=1 // pred_check
      _
    $region11: #{tpu_custom_call.1} parent=1 // pred_check_branch
      %977 = sbr.rel (0) target = $region13
    $region12: #{tpu_custom_call.1} parent=1 // pred_region
      %s979 = ssub.s32 128, 128
      %980 = vsyncadd [#allocation3], %s979
      %s982 = sshll.u32 [#allocation2], 4
      %s983 = int_to_ptr.vmem [resolvable:$true] %s982
      %985 = dma.vmem_to_hbm [thread:$0]  %s983, 128, %s2, [#allocation3]
    $region13: #{tpu_custom_call.1} parent=1 // pred_fallthru
      _
    // Predicated region
    $region14: #{tpu_custom_call.1} parent=1 // pred_check
      _
    $region15: #{tpu_custom_call.1} parent=1 // pred_check_branch
      %987 = sbr.rel (0) target = $region17
    $region16: #{tpu_custom_call.1} parent=1 // pred_region
      %988 = dma.done [#allocation3], 128
    $region17: #{tpu_custom_call.1} parent=1 // pred_fallthru
      _
    %989 = vsyncpa [#allocation3], 1

</llo_original>
